<compile_context>
chip_gen: v7x
topology: tpu7x:2x2x1
jax: 0.10.0
libtpu: 0.0.40
codegen_flags: <defaults>
</compile_context>

<pallas_src>
import functools

import jax
import jax.numpy as jnp
from jax import lax
from jax.experimental import pallas as pl
from jax.experimental.pallas import tpu as pltpu


def _ceil_to(x, m):
    return ((x + m - 1) // m) * m


def _cdiv(a, b):
    return (a + b - 1) // b


def _rpn_regr_loss_kernel(yt_ref, yp_ref, total_ref, count_ref,
                          loss_acc, cnt_acc, *, sigma, n_anchors, sub, bpc):
    # yt_ref : (3, sub, 128)  channel-major targets [cls, v1, v2], anchors on (sublane, lane)
    # yp_ref : (2, sub, 128)  channel-major predictions
    # total_ref / count_ref : (1, 1, 1) per-split partial outputs (written at finalize)
    # loss_acc / cnt_acc    : (8, 128) f32 VMEM vector accumulators (persist across steps)
    c = pl.program_id(0)          # split index ("parallel", feeds both TCs on v7x)
    i = pl.program_id(1)          # sequential anchor-slab index ("arbitrary")

    @pl.when(i == 0)
    def _init():
        loss_acc[...] = jnp.zeros_like(loss_acc)
        cnt_acc[...] = jnp.zeros_like(cnt_acc)

    yt = yt_ref[...].astype(jnp.float32)          # (3, sub, 128); no-op if already f32
    yp = yp_ref[...].astype(jnp.float32)          # (2, sub, 128)
    cls = yt[0]                                   # (sub, 128)
    regr_true = yt[1:3]                           # (2, sub, 128)

    # Anchor ids of this slab: masks the ragged [n_anchors, pad) tail and any
    # clamped/overflow slab produced by the 2-way split (mask uses the *unclamped*
    # logical slab index, so duplicated reads contribute exactly zero).
    block_idx = c * bpc + i
    base = block_idx * (sub * 128)
    anchor_id = (base
                 + lax.broadcasted_iota(jnp.int32, (sub, 128), 0) * 128
                 + lax.broadcasted_iota(jnp.int32, (sub, 128), 1))
    keep = (cls == 1.0) & (anchor_id < n_anchors)          # (sub, 128) bool

    inv_sigma = 1.0 / sigma
    diff = jnp.abs(regr_true - yp)                          # (2, sub, 128)
    elem = jnp.where(diff < inv_sigma,
                     (0.5 * sigma) * diff * diff,
                     diff - 0.5 * inv_sigma)
    elem = jnp.where(keep[None, :, :], elem, 0.0)           # NaN-safe gather-equivalent

    # Pure-VPU partial sums into (8,128) accumulators: no per-step cross-lane XLU
    # reduce and no scalar loop-carried dependency. Reshapes are sublane-aligned
    # (sub is a multiple of 8) so they are layout-free.
    loss_acc[...] += jnp.sum(elem.reshape(-1, 8, 128), axis=0)
    cnt_acc[...] += jnp.sum(keep.astype(jnp.float32).reshape(-1, 8, 128), axis=0)

    @pl.when(i == pl.num_programs(1) - 1)
    def _finalize():
        total_ref[...] = jnp.sum(loss_acc[...]).reshape(1, 1, 1)
        count_ref[...] = jnp.sum(cnt_acc[...]).reshape(1, 1, 1)


def rpn_regr_loss(y_pred, y_true, sigma=9.0, max_anchors_per_block=262144,
                  num_splits=2):
    """y_pred: (B, N, 2), y_true: (B, N, 3) with channels [cls, v1, v2].
    Uses batch element 0 only (matching the PyTorch forward). Returns a scalar f32."""
    n = int(y_true.shape[1])

    # Channel-major, lane-dense layout (anchors on lanes). No wrapper astype; only a
    # <=1023-anchor pad for (8,128) alignment (the ragged tail is masked in-kernel).
    # TODO(synk): if the producer already emits channel-major (C, N) f32 data, these
    # two transposes disappear entirely; allow_input_fusion below lets XLA fold them
    # into the pallas operands instead of a separate HBM round-trip.
    yt = jnp.transpose(y_true[0])                 # (3, N)
    yp = jnp.transpose(y_pred[0])                 # (2, N)
    n_pad = _ceil_to(max(n, 1), 1024)             # 8 sublanes x 128 lanes
    if n_pad != n:
        yt = jnp.pad(yt, ((0, 0), (0, n_pad - n)))
        yp = jnp.pad(yp, ((0, 0), (0, n_pad - n)))
    s = n_pad // 128                              # sublane-groups (multiple of 8)
    yt3 = yt.reshape(3, s, 128)
    yp3 = yp.reshape(2, s, 128)

    # ~256K anchors per step => (3+2, 2048, 128) f32 ~= 5 MB/step, ~10.5 MB
    # double-buffered: inside v5e's 16 MiB and v6e/v7x's 32 MiB scoped-VMEM defaults.
    sub_cap = max(8, (max_anchors_per_block // 128) // 8 * 8)
    sub = min(sub_cap, s)
    n_blocks = _cdiv(s, sub)
    splits = max(1, min(int(num_splits), n_blocks))
    bpc = _cdiv(n_blocks, splits)                 # sequential slabs per split

    def slab_map(c, i):
        # Clamp overflow slabs of the last split back in range; they are fully
        # masked in-kernel (anchor_id >= n), so duplicated reads contribute zero.
        return (0, jnp.minimum(c * bpc + i, n_blocks - 1), 0)

    kernel = functools.partial(_rpn_regr_loss_kernel, sigma=float(sigma),
                               n_anchors=n, sub=sub, bpc=bpc)

    totals, counts = pl.pallas_call(
        kernel,
        out_shape=(jax.ShapeDtypeStruct((splits, 1, 1), jnp.float32),
                   jax.ShapeDtypeStruct((splits, 1, 1), jnp.float32)),
        grid_spec=pltpu.PrefetchScalarGridSpec(
            num_scalar_prefetch=0,
            grid=(splits, bpc),
            in_specs=[
                pl.BlockSpec((3, sub, 128), slab_map),
                pl.BlockSpec((2, sub, 128), slab_map),
            ],
            out_specs=[
                pl.BlockSpec((1, 1, 1), lambda c, i: (c, 0, 0)),
                pl.BlockSpec((1, 1, 1), lambda c, i: (c, 0, 0)),
            ],
            scratch_shapes=[
                pltpu.VMEM((8, 128), jnp.float32),   # per-lane loss partial sums
                pltpu.VMEM((8, 128), jnp.float32),   # per-lane kept-anchor counts
            ],
        ),
        compiler_params=pltpu.CompilerParams(
            dimension_semantics=("parallel", "arbitrary"),
            allow_input_fusion=[True, True],
        ),
    )(yt3, yp3)

    total = jnp.sum(totals)
    count = jnp.sum(counts)
    return jnp.where(count > 0.0, total / jnp.maximum(count, 1.0),
                     jnp.float32(0.0))


def _reference_loss(y_pred, y_true, sigma=9.0):
    # Pure-JAX reference mirroring the PyTorch code (mask form of the gather).
    cls = y_true[0, :, 0]
    regr_true = y_true[0, :, 1:3]
    regr_pred = y_pred[0]
    keep = cls == 1.0
    diff = jnp.abs(regr_true - regr_pred)
    elem = jnp.where(diff < 1.0 / sigma, 0.5 * sigma * diff ** 2, diff - 0.5 / sigma)
    elem = jnp.where(keep[:, None], elem, 0.0)
    count = jnp.sum(keep.astype(jnp.float32))
    return jnp.where(count > 0.0, jnp.sum(elem) / jnp.maximum(count, 1.0), 0.0)


if __name__ == "__main__":
    key = jax.random.PRNGKey(0)
    k1, k2, k3, k4, k5, k6 = jax.random.split(key, 6)

    # Case 1: small, 128-aligned anchor count (single slab per split).
    B, N = 2, 256
    y_pred = jax.random.normal(k1, (B, N, 2), dtype=jnp.float32)
    cls = (jax.random.uniform(k2, (B, N, 1)) < 0.3).astype(jnp.float32)
    regr = jax.random.normal(k3, (B, N, 2), dtype=jnp.float32)
    y_true = jnp.concatenate([cls, regr], axis=-1)
    loss = jax.block_until_ready(rpn_regr_loss(y_pred, y_true, sigma=9.0))
    ref = jax.block_until_ready(_reference_loss(y_pred, y_true, sigma=9.0))
    assert jnp.allclose(loss, ref, rtol=1e-4, atol=1e-5), (loss, ref)

    # Case 2: ragged anchor count (not a multiple of 128) + multi-slab streaming
    # + 2-way split with a clamped overflow slab.
    N2 = 2500
    y_pred2 = jax.random.normal(k4, (1, N2, 2), dtype=jnp.float32)
    cls2 = (jax.random.uniform(k5, (1, N2, 1)) < 0.25).astype(jnp.float32)
    regr2 = jax.random.normal(k6, (1, N2, 2), dtype=jnp.float32)
    y_true2 = jnp.concatenate([cls2, regr2], axis=-1)
    loss2 = jax.block_until_ready(
        rpn_regr_loss(y_pred2, y_true2, sigma=9.0, max_anchors_per_block=1024))
    ref2 = jax.block_until_ready(_reference_loss(y_pred2, y_true2, sigma=9.0))
    assert jnp.allclose(loss2, ref2, rtol=1e-4, atol=1e-5), (loss2, ref2)

    # Case 3: no kept anchors -> loss must be exactly 0.0 (PyTorch fallback branch).
    y_true0 = y_true.at[:, :, 0].set(0.0)
    loss0 = jax.block_until_ready(rpn_regr_loss(y_pred, y_true0, sigma=9.0))
    assert float(loss0) == 0.0, loss0

    print("KERNEL_OK")
</pallas_src>

<mosaic_0001>
module attributes {stable_mosaic.version = 11 : i64} {
  func.func @_rpn_regr_loss_kernel(%arg0: i32, %arg1: i32, %arg2: memref<3x8x128xf32, #tpu.memory_space<vmem>>, %arg3: memref<2x8x128xf32, #tpu.memory_space<vmem>>, %arg4: memref<1x1x1xf32, #tpu.memory_space<vmem>>, %arg5: memref<1x1x1xf32, #tpu.memory_space<vmem>>, %arg6: memref<8x128xf32, #tpu.memory_space<vmem>>, %arg7: memref<8x128xf32, #tpu.memory_space<vmem>>) attributes {dimension_semantics = [#tpu.dimension_semantics<parallel>, #tpu.dimension_semantics<arbitrary>], iteration_bounds = array<i64: 1, 1>, scalar_prefetch = 0 : i64, scratch_operands = 2 : i64, tpu.core_type = #tpu.core_type<tc>, window_params = [{transform_indices = @transform_0, window_bounds = array<i64: 3, 8, 128>}, {transform_indices = @transform_1, window_bounds = array<i64: 2, 8, 128>}, {transform_indices = @transform_2, window_bounds = array<i64: 1, 1, 1>}, {transform_indices = @transform_3, window_bounds = array<i64: 1, 1, 1>}]} {
    %c0_i32 = arith.constant 0 : i32
    %0 = arith.cmpi eq, %arg1, %c0_i32 : i32
    %1 = arith.extui %0 : i1 to i32
    %c0_i32_0 = arith.constant 0 : i32
    %2 = arith.cmpi ne, %1, %c0_i32_0 : i32
    scf.if %2 {
      %cst_22 = arith.constant 0.000000e+00 : f32
      %52 = vector.broadcast %cst_22 : f32 to vector<8x128xf32>
      %c0_23 = arith.constant 0 : index
      %c0_24 = arith.constant 0 : index
      %53 = vector.load %arg6[%c0_23, %c0_24] : memref<8x128xf32, #tpu.memory_space<vmem>>, vector<8x128xf32>
      tpu.vector_store %arg6[%c0_23, %c0_24], %52 {strides = array<i32>} : memref<8x128xf32, #tpu.memory_space<vmem>>, vector<8x128xf32>,
      %cst_25 = arith.constant 0.000000e+00 : f32
      %54 = vector.broadcast %cst_25 : f32 to vector<8x128xf32>
      %c0_26 = arith.constant 0 : index
      %c0_27 = arith.constant 0 : index
      %55 = vector.load %arg7[%c0_26, %c0_27] : memref<8x128xf32, #tpu.memory_space<vmem>>, vector<8x128xf32>
      tpu.vector_store %arg7[%c0_26, %c0_27], %54 {strides = array<i32>} : memref<8x128xf32, #tpu.memory_space<vmem>>, vector<8x128xf32>,
    } else {
    }
    %c0 = arith.constant 0 : index
    %c0_1 = arith.constant 0 : index
    %c0_2 = arith.constant 0 : index
    %3 = vector.load %arg2[%c0, %c0_1, %c0_2] : memref<3x8x128xf32, #tpu.memory_space<vmem>>, vector<3x8x128xf32>
    %c0_3 = arith.constant 0 : index
    %c0_4 = arith.constant 0 : index
    %c0_5 = arith.constant 0 : index
    %4 = vector.load %arg3[%c0_3, %c0_4, %c0_5] : memref<2x8x128xf32, #tpu.memory_space<vmem>>, vector<2x8x128xf32>
    %5 = vector.extract_strided_slice %3 {offsets = [0, 0, 0], sizes = [1, 8, 128], strides = [1, 1, 1]} : vector<3x8x128xf32> to vector<1x8x128xf32>
    %6 = vector.shape_cast %5 : vector<1x8x128xf32> to vector<8x128xf32>
    %7 = vector.extract_strided_slice %3 {offsets = [1, 0, 0], sizes = [2, 8, 128], strides = [1, 1, 1]} : vector<3x8x128xf32> to vector<2x8x128xf32>
    %c1_i32 = arith.constant 1 : i32
    %8 = arith.muli %arg0, %c1_i32 : i32
    %9 = arith.addi %8, %arg1 : i32
    %c1024_i32 = arith.constant 1024 : i32
    %10 = arith.muli %9, %c1024_i32 : i32
    %11 = tpu.iota {dimensions = array<i32: 0>} : vector<8x128xi32>
    %c128_i32 = arith.constant 128 : i32
    %12 = vector.broadcast %c128_i32 : i32 to vector<8x128xi32>
    %13 = arith.muli %11, %12 : vector<8x128xi32>
    %14 = vector.broadcast %10 : i32 to vector<8x128xi32>
    %15 = arith.addi %14, %13 : vector<8x128xi32>
    %16 = tpu.iota {dimensions = array<i32: 1>} : vector<8x128xi32>
    %17 = arith.addi %15, %16 : vector<8x128xi32>
    %cst = arith.constant 1.000000e+00 : f32
    %18 = vector.broadcast %cst : f32 to vector<8x128xf32>
    %19 = arith.cmpf oeq, %6, %18 : vector<8x128xf32>
    %c256_i32 = arith.constant 256 : i32
    %20 = vector.broadcast %c256_i32 : i32 to vector<8x128xi32>
    %21 = arith.cmpi slt, %17, %20 : vector<8x128xi32>
    %22 = arith.andi %19, %21 : vector<8x128xi1>
    %23 = arith.subf %7, %4 : vector<2x8x128xf32>
    %24 = math.absf %23 : vector<2x8x128xf32>
    %cst_6 = arith.constant 0.111111112 : f32
    %25 = vector.broadcast %cst_6 : f32 to vector<2x8x128xf32>
    %26 = arith.cmpf olt, %24, %25 : vector<2x8x128xf32>
    %cst_7 = arith.constant 4.500000e+00 : f32
    %27 = vector.broadcast %cst_7 : f32 to vector<2x8x128xf32>
    %28 = arith.mulf %27, %24 : vector<2x8x128xf32>
    %29 = arith.mulf %28, %24 : vector<2x8x128xf32>
    %cst_8 = arith.constant 0.055555556 : f32
    %30 = vector.broadcast %cst_8 : f32 to vector<2x8x128xf32>
    %31 = arith.subf %24, %30 : vector<2x8x128xf32>
    %32 = arith.select %26, %29, %31 : vector<2x8x128xi1>, vector<2x8x128xf32>
    %33 = vector.shape_cast %22 : vector<8x128xi1> to vector<1x8x128xi1>
    %cst_9 = arith.constant 0.000000e+00 : f32
    %34 = vector.shape_cast %33 : vector<1x8x128xi1> to vector<1x8x128xi1>
    %35 = vector.broadcast %34 : vector<1x8x128xi1> to vector<2x8x128xi1>
    %36 = vector.broadcast %cst_9 : f32 to vector<2x8x128xf32>
    %37 = arith.select %35, %32, %36 : vector<2x8x128xi1>, vector<2x8x128xf32>
    %c0_10 = arith.constant 0 : index
    %c0_11 = arith.constant 0 : index
    %38 = vector.load %arg6[%c0_10, %c0_11] : memref<8x128xf32, #tpu.memory_space<vmem>>, vector<8x128xf32>
    %cst_12 = arith.constant dense<0.000000e+00> : vector<8x128xf32>
    %39 = vector.multi_reduction <add>, %37, %cst_12 [0] : vector<2x8x128xf32> to vector<8x128xf32>
    %40 = arith.addf %38, %39 : vector<8x128xf32>
    %c0_13 = arith.constant 0 : index
    %c0_14 = arith.constant 0 : index
    %41 = vector.load %arg6[%c0_13, %c0_14] : memref<8x128xf32, #tpu.memory_space<vmem>>, vector<8x128xf32>
    tpu.vector_store %arg6[%c0_13, %c0_14], %40 {strides = array<i32>} : memref<8x128xf32, #tpu.memory_space<vmem>>, vector<8x128xf32>,
    %c0_15 = arith.constant 0 : index
    %c0_16 = arith.constant 0 : index
    %42 = vector.load %arg7[%c0_15, %c0_16] : memref<8x128xf32, #tpu.memory_space<vmem>>, vector<8x128xf32>
    %43 = arith.extui %22 : vector<8x128xi1> to vector<8x128xi32>
    %44 = arith.sitofp %43 : vector<8x128xi32> to vector<8x128xf32>
    %45 = vector.shape_cast %44 : vector<8x128xf32> to vector<1x8x128xf32>
    %cst_17 = arith.constant dense<0.000000e+00> : vector<8x128xf32>
    %46 = vector.multi_reduction <add>, %45, %cst_17 [0] : vector<1x8x128xf32> to vector<8x128xf32>
    %47 = arith.addf %42, %46 : vector<8x128xf32>
    %c0_18 = arith.constant 0 : index
    %c0_19 = arith.constant 0 : index
    %48 = vector.load %arg7[%c0_18, %c0_19] : memref<8x128xf32, #tpu.memory_space<vmem>>, vector<8x128xf32>
    tpu.vector_store %arg7[%c0_18, %c0_19], %47 {strides = array<i32>} : memref<8x128xf32, #tpu.memory_space<vmem>>, vector<8x128xf32>,
    %c0_i32_20 = arith.constant 0 : i32
    %49 = arith.cmpi eq, %arg1, %c0_i32_20 : i32
    %50 = arith.extui %49 : i1 to i32
    %c0_i32_21 = arith.constant 0 : i32
    %51 = arith.cmpi ne, %50, %c0_i32_21 : i32
    scf.if %51 {
      %c0_22 = arith.constant 0 : index
      %c0_23 = arith.constant 0 : index
      %52 = vector.load %arg6[%c0_22, %c0_23] : memref<8x128xf32, #tpu.memory_space<vmem>>, vector<8x128xf32>
      %53 = vector.shape_cast %52 : vector<8x128xf32> to vector<1x8x128xf32>
      %cst_24 = arith.constant dense<0.000000e+00> : vector<1xf32>
      %54 = vector.multi_reduction <add>, %53, %cst_24 [1, 2] : vector<1x8x128xf32> to vector<1xf32>
      %55 = vector.shape_cast %54 : vector<1xf32> to vector<1x1x1xf32>
      %56 = vector.extract %55[0, 0, 0] : f32 from vector<1x1x1xf32>
      %57 = vector.broadcast %56 : f32 to vector<1x1x1xf32>
      %c0_25 = arith.constant 0 : index
      %c0_26 = arith.constant 0 : index
      %c0_27 = arith.constant 0 : index
      %58 = vector.load %arg4[%c0_25, %c0_26, %c0_27] : memref<1x1x1xf32, #tpu.memory_space<vmem>>, vector<1x1x1xf32>
      tpu.vector_store %arg4[%c0_25, %c0_26, %c0_27], %57 {strides = array<i32>} : memref<1x1x1xf32, #tpu.memory_space<vmem>>, vector<1x1x1xf32>,
      %c0_28 = arith.constant 0 : index
      %c0_29 = arith.constant 0 : index
      %59 = vector.load %arg7[%c0_28, %c0_29] : memref<8x128xf32, #tpu.memory_space<vmem>>, vector<8x128xf32>
      %60 = vector.shape_cast %59 : vector<8x128xf32> to vector<1x8x128xf32>
      %cst_30 = arith.constant dense<0.000000e+00> : vector<1xf32>
      %61 = vector.multi_reduction <add>, %60, %cst_30 [1, 2] : vector<1x8x128xf32> to vector<1xf32>
      %62 = vector.shape_cast %61 : vector<1xf32> to vector<1x1x1xf32>
      %63 = vector.extract %62[0, 0, 0] : f32 from vector<1x1x1xf32>
      %64 = vector.broadcast %63 : f32 to vector<1x1x1xf32>
      %c0_31 = arith.constant 0 : index
      %c0_32 = arith.constant 0 : index
      %c0_33 = arith.constant 0 : index
      %65 = vector.load %arg5[%c0_31, %c0_32, %c0_33] : memref<1x1x1xf32, #tpu.memory_space<vmem>>, vector<1x1x1xf32>
      tpu.vector_store %arg5[%c0_31, %c0_32, %c0_33], %64 {strides = array<i32>} : memref<1x1x1xf32, #tpu.memory_space<vmem>>, vector<1x1x1xf32>,
    } else {
    }
    return
  }
  func.func @transform_0(%arg0: i32, %arg1: i32) -> (i32, i32, i32) {
    %c1_i32 = arith.constant 1 : i32
    %0 = arith.muli %arg0, %c1_i32 : i32
    %1 = arith.addi %0, %arg1 : i32
    %c0_i32 = arith.constant 0 : i32
    %2 = arith.minsi %1, %c0_i32 : i32
    %c0_i32_0 = arith.constant 0 : i32
    %c0_i32_1 = arith.constant 0 : i32
    %c0_i32_2 = arith.constant 0 : i32
    return %c0_i32_0, %2, %c0_i32_1 : i32, i32, i32
  }
  func.func @transform_1(%arg0: i32, %arg1: i32) -> (i32, i32, i32) {
    %c1_i32 = arith.constant 1 : i32
    %0 = arith.muli %arg0, %c1_i32 : i32
    %1 = arith.addi %0, %arg1 : i32
    %c0_i32 = arith.constant 0 : i32
    %2 = arith.minsi %1, %c0_i32 : i32
    %c0_i32_0 = arith.constant 0 : i32
    %c0_i32_1 = arith.constant 0 : i32
    %c0_i32_2 = arith.constant 0 : i32
    return %c0_i32_0, %2, %c0_i32_1 : i32, i32, i32
  }
  func.func @transform_2(%arg0: i32, %arg1: i32) -> (i32, i32, i32) {
    %c0_i32 = arith.constant 0 : i32
    %c0_i32_0 = arith.constant 0 : i32
    %c0_i32_1 = arith.constant 0 : i32
    return %arg0, %c0_i32, %c0_i32_0 : i32, i32, i32
  }
  func.func @transform_3(%arg0: i32, %arg1: i32) -> (i32, i32, i32) {
    %c0_i32 = arith.constant 0 : i32
    %c0_i32_0 = arith.constant 0 : i32
    %c0_i32_1 = arith.constant 0 : i32
    return %arg0, %c0_i32, %c0_i32_0 : i32, i32, i32
  }
}

</mosaic_0001>

<llo_original>
// kernel: tpu_custom_call.1
$region0: #{tpu_custom_call.1}
  #allocation0 [shape = 'u32[]', space=smem, size = 0x4, offset = 0x4, fixed_abs, tag = 'smem constant byte address 0x4 - core index']
  #allocation1 [shape = 'u32[144,128]{1,0:T(1,128)}', space=vmem, size = 0x12000, scoped, tag = 'internal scratch']
  #allocation2 [shape = 'f32[8,128]{1,0:T(8,128)}', space=vmem, size = 0x1000, scoped, tag = 'scratch operand']
  #allocation3 [shape = 'f32[8,128]{1,0:T(8,128)}', space=vmem, size = 0x1000, scoped, tag = 'scratch operand']
  %s0 = inlined_call_operand.hbm [shape: f32[3,8,128], index: 0, kind: input, shape index: {}]
  %s1 = inlined_call_operand.hbm [shape: f32[2,8,128], index: 1, kind: input, shape index: {}]
  %s2 = inlined_call_operand.hbm [shape: f32[1,1,1], index: 2, kind: output, shape index: {0}]
  %s3 = inlined_call_operand.hbm [shape: f32[1,1,1], index: 3, kind: output, shape index: {1}]
  %4 = xla_tuple %s2, %s3
  %s5 = sld [smem:[#allocation0]]
  $region42: #{tpu_custom_call.1} parent=0
    _
  %s7 = ssub.s32 1, %s5
  %s8 = scalar_select 0, %s7, %s5
  $region1: #{tpu_custom_call.1} parent=0
    #allocation4 [shape = 'u8[12288]{0}', space=vmem, size = 0x3000, scoped, tag = 'input window, operand 0, single buffered']
    #allocation5 [shape = 's32[1]{0}', space=sflag, size = 0x4, scoped, tag = 'scoped memory for tpu_custom_call.1']
    #allocation6 [shape = 's32[1]{0}', space=sflag, size = 0x4, scoped, tag = 'scoped memory for tpu_custom_call.1']
    #allocation7 [shape = 'u8[8192]{0}', space=vmem, size = 0x2000, scoped, tag = 'input window, operand 1, single buffered']
    #allocation8 [shape = 's32[1]{0}', space=sflag, size = 0x4, scoped, tag = 'scoped memory for tpu_custom_call.1']
    #allocation9 [shape = 'u8[512]{0}', space=vmem, size = 0x400, scoped, tag = 'output window, operand 0, single buffered']
    #allocation10 [shape = 'u8[512]{0}', space=vmem, size = 0x400, scoped, tag = 'output window, operand 1, single buffered']
    #allocation11 [shape = 's32[1]{0}', space=sflag, size = 0x4, scoped, tag = 'scoped memory for tpu_custom_call.1']
    %9 = vsyncpa [#allocation5], 0
    %10 = vsyncpa [#allocation8], 0
    %11 = vsyncpa [#allocation6], 0
    %12 = vsyncpa [#allocation11], 0
    // Predicated region
    $region2: #{tpu_custom_call.1} parent=1 // pred_check
      _
    $region3: #{tpu_custom_call.1} parent=1 // pred_check_branch
      %14 = sbr.rel (0) target = $region5
    $region4: #{tpu_custom_call.1} parent=1 // pred_region
      %s15 = sadd.s32 0, 0
      %p16 = scmp.lt.s32.totalorder %s15, 0
      %s17 = scalar_select %p16, %s15, 0
      %s19 = ssub.s32 384, 384
      %20 = vsyncadd [#allocation5], %s19
      %s21 = smul.addr %s17, 128
      %s22 = scalar_lea.hbm %s0, %s21
      %s23 = sshll.u32 [#allocation4], 4
      %s24 = int_to_ptr.vmem [resolvable:$true] %s23
      %29 = dma.hbm_to_vmem [thread:$0]  %s22, 384, %s24, [#allocation5], 128, 128, 8
    $region5: #{tpu_custom_call.1} parent=1 // pred_fallthru
      _
    // Predicated region
    $region6: #{tpu_custom_call.1} parent=1 // pred_check
      _
    $region7: #{tpu_custom_call.1} parent=1 // pred_check_branch
      %31 = sbr.rel (0) target = $region9
    $region8: #{tpu_custom_call.1} parent=1 // pred_region
      %s32 = sadd.s32 0, 0
      %p33 = scmp.lt.s32.totalorder %s32, 0
      %s34 = scalar_select %p33, %s32, 0
      %s36 = ssub.s32 256, 256
      %37 = vsyncadd [#allocation8], %s36
      %s38 = smul.addr %s34, 128
      %s39 = scalar_lea.hbm %s1, %s38
      %s40 = sshll.u32 [#allocation7], 4
      %s41 = int_to_ptr.vmem [resolvable:$true] %s40
      %46 = dma.hbm_to_vmem [thread:$0]  %s39, 256, %s41, [#allocation8], 128, 128, 8
    $region9: #{tpu_custom_call.1} parent=1 // pred_fallthru
      _
    // Predicated region
    $region10: #{tpu_custom_call.1} parent=1 // pred_check
      _
    $region11: #{tpu_custom_call.1} parent=1 // pred_check_branch
      %48 = sbr.rel (0) target = $region13
    $region12: #{tpu_custom_call.1} parent=1 // pred_region
      %49 = dma.done [#allocation5], 384
    $region13: #{tpu_custom_call.1} parent=1 // pred_fallthru
      _
    // Predicated region
    $region14: #{tpu_custom_call.1} parent=1 // pred_check
      _
    $region15: #{tpu_custom_call.1} parent=1 // pred_check_branch
      %51 = sbr.rel (0) target = $region17
    $region16: #{tpu_custom_call.1} parent=1 // pred_region
      %52 = dma.done [#allocation8], 256
    $region17: #{tpu_custom_call.1} parent=1 // pred_fallthru
      _
    %s53 = sadd.s32 0, 0
    %p54 = scmp.lt.s32.totalorder %s53, 0
    %s55 = scalar_select %p54, %s53, 0
    %s56 = sadd.s32 0, 0
    %p57 = scmp.lt.s32.totalorder %s56, 0
    %s58 = scalar_select %p57, %s56, 0
    %p59 = scmp.eq.s32.totalorder 0, 0
    // Predicated region
    $region18: #{tpu_custom_call.1} parent=1 // pred_check
      %p60 = pneg %p59
    $region19: #{tpu_custom_call.1} parent=1 // pred_check_branch
      %62 = sbr.rel (%p60) target = $region21
    $region20: #{tpu_custom_call.1} parent=1 // pred_region
      %63 = vst [vmem:[#allocation2] sm:$0xff] 0.0
      %64 = vst [vmem:[#allocation3] sm:$0xff] 0.0
    $region21: #{tpu_custom_call.1} parent=1 // pred_fallthru
      _
    %v65 = vld [vmem:[#allocation4] sm:$0xff]
    %v66 = vld [vmem:[#allocation4 + $0x8] sm:$0xff]
    %v67 = vld [vmem:[#allocation4 + $0x10] sm:$0xff]
    %v68 = vld [vmem:[#allocation7] sm:$0xff]
    %v69 = vld [vmem:[#allocation7 + $0x8] sm:$0xff]
    %s70 = sadd.s32 0, 0
    %s71 = smul.u32 %s70, 1024
    %v72 = vlaneseq
    %v73 = vshrl.u32 %v72, 7
    %v74 = vmul.u32 %v73, 128
    %v75 = vstv %s71
    %v76 = vadd.s32 %v75, %v74
    %v77 = vlaneseq
    %v78 = vand.u32 %v77, 127
    %v79 = vadd.s32 %v76, %v78
    %vm80 = vcmp.eq.f32.partialorder %v65, 1.0
    %vm81 = vcmp.lt.s32.totalorder %v79, 256
    %vm82 = vmand %vm80, %vm81
    %v83 = vsub.f32 %v66, %v68
    %v84 = vsub.f32 %v67, %v69
    %v85 = vand.u32 2147483647, %v83
    %v86 = vand.u32 2147483647, %v84
    %vm87 = vcmp.lt.f32.partialorder %v85, 0.11111111
    %vm88 = vcmp.lt.f32.partialorder %v86, 0.11111111
    %v89 = vmul.f32 %v85, 4.5
    %v90 = vmul.f32 %v86, 4.5
    %v91 = vmul.f32 %v89, %v85
    %v92 = vmul.f32 %v90, %v86
    %v93 = vsub.f32 %v85, 0.055555556
    %v94 = vsub.f32 %v86, 0.055555556
    %v95 = vsel %vm87, %v91, %v93
    %v96 = vsel %vm88, %v92, %v94
    %v97 = vsel %vm82, 1, 0
    %vm98 = vcmp.eq.s32.totalorder %v97, 1
    %v99 = vsel %vm98, %v95, 0.0
    %v100 = vsel %vm98, %v96, 0.0
    %v101 = vld [vmem:[#allocation2] sm:$0xff]
    %v102 = vadd.f32 %v99, %v100
    %v103 = vadd.f32 %v101, %v102
    %104 = vst [vmem:[#allocation2] sm:$0xff] %v103
    %v105 = vld [vmem:[#allocation3] sm:$0xff]
    %v106 = vcvt.s32.f32 %v97
    %v107 = vadd.f32 %v106, 0.0
    %v108 = vadd.f32 %v105, %v107
    %109 = vst [vmem:[#allocation3] sm:$0xff] %v108
    // Predicated region
    $region22: #{tpu_custom_call.1} parent=1 // pred_check
      %p110 = pneg %p59
    $region23: #{tpu_custom_call.1} parent=1 // pred_check_branch
      %112 = sbr.rel (%p110) target = $region25
    $region24: #{tpu_custom_call.1} parent=1 // pred_region
      %v113 = vld [vmem:[#allocation2] sm:$0xff]
      %114 = vadd.xlane.f32.xlu0 %v113
      %v115 = vpop.xlane.xlu0 %114
      %v116 = vrot.slane %v115, 4
      %v117 = vadd.f32 %v115, %v116
      %v118 = vrot.slane %v117, 2
      %v119 = vadd.f32 %v117, %v118
      %v120 = vrot.slane %v119, 1
      %v121 = vadd.f32 %v119, %v120
      %s122 = vtos %v121
      %v123 = vstv %s122
      %vm124 = vcmask 0
      %125 = vst.msk [vmem:[#allocation9] sm:$0x1] %vm124, %v123
      %v126 = vld [vmem:[#allocation3] sm:$0xff]
      %127 = vadd.xlane.f32.xlu0 %v126
      %v128 = vpop.xlane.xlu0 %127
      %v129 = vrot.slane %v128, 4
      %v130 = vadd.f32 %v128, %v129
      %v131 = vrot.slane %v130, 2
      %v132 = vadd.f32 %v130, %v131
      %v133 = vrot.slane %v132, 1
      %v134 = vadd.f32 %v132, %v133
      %s135 = vtos %v134
      %v136 = vstv %s135
      %137 = vst.msk [vmem:[#allocation10] sm:$0x1] %vm124, %v136
    $region25: #{tpu_custom_call.1} parent=1 // pred_fallthru
      _
    // Predicated region
    $region26: #{tpu_custom_call.1} parent=1 // pred_check
      _
    $region27: #{tpu_custom_call.1} parent=1 // pred_check_branch
      %139 = sbr.rel (0) target = $region29
    $region28: #{tpu_custom_call.1} parent=1 // pred_region
      %s141 = ssub.s32 16, 16
      %142 = vsyncadd [#allocation6], %s141
      %s144 = sshll.u32 [#allocation9], 4
      %s145 = int_to_ptr.vmem [resolvable:$true] %s144
      %147 = dma.vmem_to_hbm [thread:$0]  %s145, 16, %s2, [#allocation6]
    $region29: #{tpu_custom_call.1} parent=1 // pred_fallthru
      _
    // Predicated region
    $region30: #{tpu_custom_call.1} parent=1 // pred_check
      _
    $region31: #{tpu_custom_call.1} parent=1 // pred_check_branch
      %149 = sbr.rel (0) target = $region33
    $region32: #{tpu_custom_call.1} parent=1 // pred_region
      %s151 = ssub.s32 16, 16
      %152 = vsyncadd [#allocation11], %s151
      %s154 = sshll.u32 [#allocation10], 4
      %s155 = int_to_ptr.vmem [resolvable:$true] %s154
      %157 = dma.vmem_to_hbm [thread:$0]  %s155, 16, %s3, [#allocation11]
    $region33: #{tpu_custom_call.1} parent=1 // pred_fallthru
      _
    // Predicated region
    $region34: #{tpu_custom_call.1} parent=1 // pred_check
      _
    $region35: #{tpu_custom_call.1} parent=1 // pred_check_branch
      %159 = sbr.rel (0) target = $region37
    $region36: #{tpu_custom_call.1} parent=1 // pred_region
      %160 = dma.done [#allocation6], 16
    $region37: #{tpu_custom_call.1} parent=1 // pred_fallthru
      _
    // Predicated region
    $region38: #{tpu_custom_call.1} parent=1 // pred_check
      _
    $region39: #{tpu_custom_call.1} parent=1 // pred_check_branch
      %162 = sbr.rel (0) target = $region41
    $region40: #{tpu_custom_call.1} parent=1 // pred_region
      %163 = dma.done [#allocation11], 16
    $region41: #{tpu_custom_call.1} parent=1 // pred_fallthru
      _
    %164 = vsyncpa [#allocation5], 1
    %165 = vsyncpa [#allocation8], 1
    %166 = vsyncpa [#allocation6], 1
    %167 = vsyncpa [#allocation11], 1

</llo_original>
